<compile_context>
chip_gen: v7x
topology: tpu7x:2x2x1
jax: 0.10.0
libtpu: 0.0.40
codegen_flags: <defaults>
</compile_context>

<pallas_src>
import jax
import jax.numpy as jnp
from jax.experimental import pallas as pl
from jax.experimental.pallas import tpu as pltpu

K_IN = 28 * 28      # 784
HID = 256
N_OUT = 10
N_PAD = 128         # output features padded 10 -> 128 for lane-dense stores


def _round_up(x, m):
    return (x + m - 1) // m * m


def mlp_kernel(x_ref, w1_ref, b1_ref, w2_ref, b2_ref, o_ref):
    # Layer 1: cast the streamed x tile to bf16 (VPU, hidden under DMA/MXU),
    # MXU matmul with f32 accumulation, bias in f32, ReLU.
    x = x_ref[...].astype(jnp.bfloat16)                       # (TB, 784)
    h = jnp.dot(x, w1_ref[...], preferred_element_type=jnp.float32)
    h = jnp.maximum(h + b1_ref[...], 0.0)                     # (TB, 256) f32
    # Layer 2: hidden activations rounded to bf16 for the MXU, f32 acc + bias.
    out = jnp.dot(h.astype(jnp.bfloat16), w2_ref[...],
                  preferred_element_type=jnp.float32)         # (TB, 128)
    o_ref[...] = (out + b2_ref[...]).astype(o_ref.dtype)


def _pick_batch_tile(B):
    # bf16 packs two rows per sublane -> round tiles to 16.
    TB = min(2048, _round_up(B, 16))
    # Keep >= 2 grid steps when the batch is big enough so v7x's two
    # TensorCores both get work (no-op on single-TC v5e/v6e).
    if B >= 32 and pl.cdiv(B, TB) < 2:
        TB = _round_up(pl.cdiv(B, 2), 16)
    return TB


def mlp_forward(x_nchw, w1, b1, w2, b2):
    """Forward matching torch: x.view(-1, 784) -> Linear -> ReLU -> Linear."""
    B = x_nchw.shape[0]
    x = x_nchw.reshape(B, K_IN)            # == torch x.view(-1, 784); no copy

    TB = _pick_batch_tile(B)
    grid = (pl.cdiv(B, TB),)               # Pallas pads the tail block

    # One-time, tiny weight prep (x itself is streamed untouched).
    w1_b = w1.astype(jnp.bfloat16)                                   # (784, 256)
    b1_2d = b1.reshape(1, HID).astype(jnp.float32)
    w2_p = jnp.zeros((HID, N_PAD), jnp.bfloat16).at[:, :N_OUT].set(
        w2.astype(jnp.bfloat16))                                     # (256, 128)
    b2_2d = jnp.zeros((1, N_PAD), jnp.float32).at[0, :N_OUT].set(
        b2.astype(jnp.float32))

    out_padded = pl.pallas_call(
        mlp_kernel,
        out_shape=jax.ShapeDtypeStruct((B, N_PAD), jnp.float32),
        grid=grid,
        in_specs=[
            pl.BlockSpec((TB, K_IN), lambda i: (i, 0)),     # x tile streams
            pl.BlockSpec((K_IN, HID), lambda i: (0, 0)),    # w1 resident
            pl.BlockSpec((1, HID), lambda i: (0, 0)),       # b1 resident
            pl.BlockSpec((HID, N_PAD), lambda i: (0, 0)),   # w2 resident
            pl.BlockSpec((1, N_PAD), lambda i: (0, 0)),     # b2 resident
        ],
        out_specs=pl.BlockSpec((TB, N_PAD), lambda i: (i, 0)),
        compiler_params=pltpu.CompilerParams(
            dimension_semantics=("parallel",),     # v7x megacore sharding
            vmem_limit_bytes=32 * 1024 * 1024,     # safe on v7x's 64 MiB VMEM
        ),
    )(x, w1_b, b1_2d, w2_p, b2_2d)

    return out_padded[:, :N_OUT]


def init_params(key):
    # Deterministic init mimicking torch.nn.Linear default:
    #   U(-1/sqrt(fan_in), +1/sqrt(fan_in))
    k1, k2, k3, k4 = jax.random.split(key, 4)
    lim1 = 1.0 / jnp.sqrt(float(K_IN))
    lim2 = 1.0 / jnp.sqrt(float(HID))
    w1 = jax.random.uniform(k1, (K_IN, HID), jnp.float32, -lim1, lim1)
    b1 = jax.random.uniform(k2, (HID,), jnp.float32, -lim1, lim1)
    w2 = jax.random.uniform(k3, (HID, N_OUT), jnp.float32, -lim2, lim2)
    b2 = jax.random.uniform(k4, (N_OUT,), jnp.float32, -lim2, lim2)
    return w1, b1, w2, b2


if __name__ == "__main__":
    key = jax.random.PRNGKey(0)
    kx, kp = jax.random.split(key)
    # Small MNIST-like batch: (B=2, C=1, H=28, W=28), NCHW.
    x = jax.random.normal(kx, (2, 1, 28, 28), jnp.float32)
    w1, b1, w2, b2 = init_params(kp)

    mlp = jax.jit(mlp_forward)
    out = jax.block_until_ready(mlp(x, w1, b1, w2, b2))

    # Plain-JAX reference with matching quantization: x/w1/w2 in bf16, hidden
    # activations rounded to bf16 before layer 2, f32 accumulation + f32 bias
    # (exactly what the kernel does).
    xq = x.reshape(2, K_IN).astype(jnp.bfloat16).astype(jnp.float32)
    w1q = w1.astype(jnp.bfloat16).astype(jnp.float32)
    w2q = w2.astype(jnp.bfloat16).astype(jnp.float32)
    h = jnp.maximum(xq @ w1q + b1, 0.0).astype(jnp.bfloat16).astype(jnp.float32)
    ref = h @ w2q + b2

    assert out.shape == (2, N_OUT)
    assert jnp.allclose(out, ref, atol=2e-2, rtol=2e-2), (
        float(jnp.max(jnp.abs(out - ref))))

    print("KERNEL_OK")
</pallas_src>

<mosaic_0001>
module attributes {stable_mosaic.version = 11 : i64} {
  func.func @mlp_kernel(%arg0: i32, %arg1: memref<16x784xf32, #tpu.memory_space<vmem>>, %arg2: memref<784x256xbf16, #tpu.memory_space<vmem>>, %arg3: memref<1x256xf32, #tpu.memory_space<vmem>>, %arg4: memref<256x128xbf16, #tpu.memory_space<vmem>>, %arg5: memref<1x128xf32, #tpu.memory_space<vmem>>, %arg6: memref<16x128xf32, #tpu.memory_space<vmem>>) attributes {dimension_semantics = [#tpu.dimension_semantics<parallel>], iteration_bounds = array<i64: 1>, scalar_prefetch = 0 : i64, scratch_operands = 0 : i64, tpu.core_type = #tpu.core_type<tc>, window_params = [{transform_indices = @transform_0, window_bounds = array<i64: 16, 784>}, {pipeline_mode = #tpu.pipeline_mode<synchronous>, transform_indices = @transform_1, window_bounds = array<i64: 784, 256>}, {pipeline_mode = #tpu.pipeline_mode<synchronous>, transform_indices = @transform_2, window_bounds = array<i64: 1, 256>}, {pipeline_mode = #tpu.pipeline_mode<synchronous>, transform_indices = @transform_3, window_bounds = array<i64: 256, 128>}, {pipeline_mode = #tpu.pipeline_mode<synchronous>, transform_indices = @transform_4, window_bounds = array<i64: 1, 128>}, {transform_indices = @transform_5, window_bounds = array<i64: 16, 128>}]} {
    %c0 = arith.constant 0 : index
    %c0_0 = arith.constant 0 : index
    %0 = vector.load %arg1[%c0, %c0_0] : memref<16x784xf32, #tpu.memory_space<vmem>>, vector<16x784xf32>
    %1 = arith.truncf %0 : vector<16x784xf32> to vector<16x784xbf16>
    %c0_1 = arith.constant 0 : index
    %c0_2 = arith.constant 0 : index
    %2 = vector.load %arg2[%c0_1, %c0_2] : memref<784x256xbf16, #tpu.memory_space<vmem>>, vector<784x256xbf16>
    %cst = arith.constant dense<0.000000e+00> : vector<16x256xf32>
    %3 = tpu.matmul %1, %2, %cst {dimension_numbers = #tpu.dot_dimension_numbers<[1], [0], [0], [1], [0, 0, 1, 1], [], []>} : vector<16x784xbf16>, vector<784x256xbf16>, vector<16x256xf32> -> vector<16x256xf32>
    %c0_3 = arith.constant 0 : index
    %c0_4 = arith.constant 0 : index
    %4 = vector.load %arg3[%c0_3, %c0_4] : memref<1x256xf32, #tpu.memory_space<vmem>>, vector<1x256xf32>
    %5 = vector.broadcast %4 : vector<1x256xf32> to vector<16x256xf32>
    %6 = arith.addf %3, %5 : vector<16x256xf32>
    %cst_5 = arith.constant 0.000000e+00 : f32
    %7 = vector.broadcast %cst_5 : f32 to vector<16x256xf32>
    %8 = arith.maximumf %6, %7 : vector<16x256xf32>
    %9 = arith.truncf %8 : vector<16x256xf32> to vector<16x256xbf16>
    %c0_6 = arith.constant 0 : index
    %c0_7 = arith.constant 0 : index
    %10 = vector.load %arg4[%c0_6, %c0_7] : memref<256x128xbf16, #tpu.memory_space<vmem>>, vector<256x128xbf16>
    %cst_8 = arith.constant dense<0.000000e+00> : vector<16x128xf32>
    %11 = tpu.matmul %9, %10, %cst_8 {dimension_numbers = #tpu.dot_dimension_numbers<[1], [0], [0], [1], [0, 0, 1, 1], [], []>} : vector<16x256xbf16>, vector<256x128xbf16>, vector<16x128xf32> -> vector<16x128xf32>
    %c0_9 = arith.constant 0 : index
    %c0_10 = arith.constant 0 : index
    %12 = vector.load %arg5[%c0_9, %c0_10] : memref<1x128xf32, #tpu.memory_space<vmem>>, vector<1x128xf32>
    %13 = vector.broadcast %12 : vector<1x128xf32> to vector<16x128xf32>
    %14 = arith.addf %11, %13 : vector<16x128xf32>
    %c0_11 = arith.constant 0 : index
    %c0_12 = arith.constant 0 : index
    %15 = vector.load %arg6[%c0_11, %c0_12] : memref<16x128xf32, #tpu.memory_space<vmem>>, vector<16x128xf32>
    tpu.vector_store %arg6[%c0_11, %c0_12], %14 {strides = array<i32>} : memref<16x128xf32, #tpu.memory_space<vmem>>, vector<16x128xf32>,
    return
  }
  func.func @transform_0(%arg0: i32) -> (i32, i32) {
    %c0_i32 = arith.constant 0 : i32
    %c0_i32_0 = arith.constant 0 : i32
    return %arg0, %c0_i32 : i32, i32
  }
  func.func @transform_1(%arg0: i32) -> (i32, i32) {
    %c0_i32 = arith.constant 0 : i32
    %c0_i32_0 = arith.constant 0 : i32
    %c0_i32_1 = arith.constant 0 : i32
    return %c0_i32, %c0_i32_0 : i32, i32
  }
  func.func @transform_2(%arg0: i32) -> (i32, i32) {
    %c0_i32 = arith.constant 0 : i32
    %c0_i32_0 = arith.constant 0 : i32
    %c0_i32_1 = arith.constant 0 : i32
    return %c0_i32, %c0_i32_0 : i32, i32
  }
  func.func @transform_3(%arg0: i32) -> (i32, i32) {
    %c0_i32 = arith.constant 0 : i32
    %c0_i32_0 = arith.constant 0 : i32
    %c0_i32_1 = arith.constant 0 : i32
    return %c0_i32, %c0_i32_0 : i32, i32
  }
  func.func @transform_4(%arg0: i32) -> (i32, i32) {
    %c0_i32 = arith.constant 0 : i32
    %c0_i32_0 = arith.constant 0 : i32
    %c0_i32_1 = arith.constant 0 : i32
    return %c0_i32, %c0_i32_0 : i32, i32
  }
  func.func @transform_5(%arg0: i32) -> (i32, i32) {
    %c0_i32 = arith.constant 0 : i32
    %c0_i32_0 = arith.constant 0 : i32
    return %arg0, %c0_i32 : i32, i32
  }
}

</mosaic_0001>

<llo_original>
// kernel: mlp_forward.1
$region0: #{mlp_forward.1}
  #allocation0 [shape = 'u32[]', space=smem, size = 0x4, offset = 0x4, fixed_abs, tag = 'smem constant byte address 0x4 - core index']
  #allocation1 [shape = 'u32[144,128]{1,0:T(1,128)}', space=vmem, size = 0x12000, scoped, tag = 'internal scratch']
  %s0 = inlined_call_operand.vmem [shape: f32[2,784], index: 0, kind: input, shape index: {}]
  %s1 = inlined_call_operand.vmem [shape: bf16[784,256], index: 1, kind: input, shape index: {}]
  %s2 = inlined_call_operand.vmem [shape: f32[1,256], index: 2, kind: input, shape index: {}]
  %s3 = inlined_call_operand.vmem [shape: bf16[256,128], index: 3, kind: input, shape index: {}]
  %s4 = inlined_call_operand.vmem [shape: f32[1,128], index: 4, kind: input, shape index: {}]
  %s5 = inlined_call_operand.hbm [shape: f32[2,128], index: 5, kind: output, shape index: {}]
  %s6 = sld [smem:[#allocation0]]
  $region30: #{mlp_forward.1} parent=0
    _
  %s8 = ssub.s32 1, %s6
  %s9 = scalar_select 0, %s8, %s6
  $region1: #{mlp_forward.1} parent=0
    #allocation2 [shape = 'u8[8192]{0}', space=vmem, size = 0x2000, scoped, tag = 'output window, operand 0, single buffered']
    #allocation3 [shape = 's32[1]{0}', space=sflag, size = 0x4, scoped, tag = 'scoped memory for mlp_forward.1']
    %10 = vsyncpa [#allocation3], 0
    // Predicated region
    $region2: #{mlp_forward.1} parent=1 // pred_check
      _
    $region3: #{mlp_forward.1} parent=1 // pred_check_branch
      %12 = sbr.rel (0) target = $region5
    $region4: #{mlp_forward.1} parent=1 // pred_region
      _
    $region5: #{mlp_forward.1} parent=1 // pred_fallthru
      _
    // Predicated region
    $region6: #{mlp_forward.1} parent=1 // pred_check
      _
    $region7: #{mlp_forward.1} parent=1 // pred_check_branch
      %14 = sbr.rel (0) target = $region9
    $region8: #{mlp_forward.1} parent=1 // pred_region
      _
    $region9: #{mlp_forward.1} parent=1 // pred_fallthru
      _
    // Predicated region
    $region10: #{mlp_forward.1} parent=1 // pred_check
      _
    $region11: #{mlp_forward.1} parent=1 // pred_check_branch
      %16 = sbr.rel (0) target = $region13
    $region12: #{mlp_forward.1} parent=1 // pred_region
      _
    $region13: #{mlp_forward.1} parent=1 // pred_fallthru
      _
    // Predicated region
    $region14: #{mlp_forward.1} parent=1 // pred_check
      _
    $region15: #{mlp_forward.1} parent=1 // pred_check_branch
      %18 = sbr.rel (0) target = $region17
    $region16: #{mlp_forward.1} parent=1 // pred_region
      _
    $region17: #{mlp_forward.1} parent=1 // pred_fallthru
      _
    // Predicated region
    $region18: #{mlp_forward.1} parent=1 // pred_check
      _
    $region19: #{mlp_forward.1} parent=1 // pred_check_branch
      %20 = sbr.rel (0) target = $region21
    $region20: #{mlp_forward.1} parent=1 // pred_region
      _
    $region21: #{mlp_forward.1} parent=1 // pred_fallthru
      _
    %v22 = vld [vmem:[%s0] sm:$0xff]
    %v23 = vld [vmem:[%s0 + $0x8] sm:$0x3f]
    %v24 = vld [vmem:[%s0 + $0xe] sm:$0xff]
    %v25 = vld [vmem:[%s0 + $0x16] sm:$0x3f]
    %v26 = vld [vmem:[%s0 + $0x1c] sm:$0xff]
    %v27 = vld [vmem:[%s0 + $0x24] sm:$0x3f]
    %v28 = vld [vmem:[%s0 + $0x2a] sm:$0xff]
    %v29 = vld [vmem:[%s0 + $0x32] sm:$0x3f]
    %v30 = vld [vmem:[%s0 + $0x38] sm:$0xff]
    %v31 = vld [vmem:[%s0 + $0x40] sm:$0x3f]
    %v32 = vld [vmem:[%s0 + $0x46] sm:$0xff]
    %v33 = vld [vmem:[%s0 + $0x4e] sm:$0x3f]
    %v34 = vld [vmem:[%s0 + $0x54] sm:$0xff]
    %v35 = vld [vmem:[%s0 + $0x5c] sm:$0x3f]
    %v36 = vld [vmem:[%s0 + $0x62] sm:$0xff]
    %v37 = vld [vmem:[%s0 + $0x6a] sm:$0x3f]
    %v54 = vcombine.low %v22, %v24
    %v55 = vcombine.high %v22, %v24
    %v56 = vcombine.low %v26, %v28
    %v57 = vcombine.high %v26, %v28
    %v59 = vunpack.c.l.s4 1983009808
    %v60 = vunpack.c.0.s8 %v59
    %v61 = vlaneseq
    %v62 = vshrl.u32 %v61, 7
    %v63 = vsub.s32 %v60, %v62
    %v64 = vrot.slane %v54, %v63
    %v66 = vunpack.c.l.s4 1983009808
    %v67 = vunpack.c.0.s8 %v66
    %v68 = vlaneseq
    %v69 = vshrl.u32 %v68, 7
    %v70 = vsub.s32 %v67, %v69
    %v71 = vrot.slane %v55, %v70
    %v73 = vunpack.c.l.s4 1983009808
    %v74 = vunpack.c.0.s8 %v73
    %v75 = vlaneseq
    %v76 = vshrl.u32 %v75, 7
    %v77 = vsub.s32 %v74, %v76
    %v78 = vrot.slane %v56, %v77
    %v80 = vunpack.c.l.s4 1983009808
    %v81 = vunpack.c.0.s8 %v80
    %v82 = vlaneseq
    %v83 = vshrl.u32 %v82, 7
    %v84 = vsub.s32 %v81, %v83
    %v85 = vrot.slane %v57, %v84
    %v86 = vcombine.low %v64, %v78
    %v87 = vcombine.high %v64, %v78
    %v88 = vcombine.low %v71, %v85
    %v89 = vcombine.high %v71, %v85
    %v90 = vcombine.low %v23, %v25
    %v91 = vcombine.high %v23, %v25
    %v92 = vcombine.low %v27, %v29
    %v93 = vcombine.high %v27, %v29
    %v95 = vunpack.c.l.s4 1983009808
    %v96 = vunpack.c.0.s8 %v95
    %v97 = vlaneseq
    %v98 = vshrl.u32 %v97, 7
    %v99 = vsub.s32 %v96, %v98
    %v100 = vrot.slane %v90, %v99
    %v102 = vunpack.c.l.s4 1983009808
    %v103 = vunpack.c.0.s8 %v102
    %v104 = vlaneseq
    %v105 = vshrl.u32 %v104, 7
    %v106 = vsub.s32 %v103, %v105
    %v107 = vrot.slane %v91, %v106
    %v109 = vunpack.c.l.s4 1983009808
    %v110 = vunpack.c.0.s8 %v109
    %v111 = vlaneseq
    %v112 = vshrl.u32 %v111, 7
    %v113 = vsub.s32 %v110, %v112
    %v114 = vrot.slane %v92, %v113
    %v116 = vunpack.c.l.s4 1983009808
    %v117 = vunpack.c.0.s8 %v116
    %v118 = vlaneseq
    %v119 = vshrl.u32 %v118, 7
    %v120 = vsub.s32 %v117, %v119
    %v121 = vrot.slane %v93, %v120
    %v122 = vcombine.low %v100, %v114
    %v123 = vcombine.high %v100, %v114
    %v124 = vcombine.low %v107, %v121
    %v125 = vcombine.low %v30, %v32
    %v126 = vcombine.high %v30, %v32
    %v127 = vcombine.low %v34, %v36
    %v128 = vcombine.high %v34, %v36
    %v130 = vunpack.c.l.s4 1983009808
    %v131 = vunpack.c.0.s8 %v130
    %v132 = vlaneseq
    %v133 = vshrl.u32 %v132, 7
    %v134 = vsub.s32 %v131, %v133
    %v135 = vrot.slane %v125, %v134
    %v137 = vunpack.c.l.s4 1983009808
    %v138 = vunpack.c.0.s8 %v137
    %v139 = vlaneseq
    %v140 = vshrl.u32 %v139, 7
    %v141 = vsub.s32 %v138, %v140
    %v142 = vrot.slane %v126, %v141
    %v144 = vunpack.c.l.s4 1983009808
    %v145 = vunpack.c.0.s8 %v144
    %v146 = vlaneseq
    %v147 = vshrl.u32 %v146, 7
    %v148 = vsub.s32 %v145, %v147
    %v149 = vrot.slane %v127, %v148
    %v151 = vunpack.c.l.s4 1983009808
    %v152 = vunpack.c.0.s8 %v151
    %v153 = vlaneseq
    %v154 = vshrl.u32 %v153, 7
    %v155 = vsub.s32 %v152, %v154
    %v156 = vrot.slane %v128, %v155
    %v157 = vcombine.low %v135, %v149
    %v158 = vcombine.high %v135, %v149
    %v159 = vcombine.low %v142, %v156
    %v160 = vcombine.high %v142, %v156
    %v161 = vcombine.low %v31, %v33
    %v162 = vcombine.high %v31, %v33
    %v163 = vcombine.low %v35, %v37
    %v164 = vcombine.high %v35, %v37
    %v166 = vunpack.c.l.s4 1983009808
    %v167 = vunpack.c.0.s8 %v166
    %v168 = vlaneseq
    %v169 = vshrl.u32 %v168, 7
    %v170 = vsub.s32 %v167, %v169
    %v171 = vrot.slane %v161, %v170
    %v173 = vunpack.c.l.s4 1983009808
    %v174 = vunpack.c.0.s8 %v173
    %v175 = vlaneseq
    %v176 = vshrl.u32 %v175, 7
    %v177 = vsub.s32 %v174, %v176
    %v178 = vrot.slane %v162, %v177
    %v180 = vunpack.c.l.s4 1983009808
    %v181 = vunpack.c.0.s8 %v180
    %v182 = vlaneseq
    %v183 = vshrl.u32 %v182, 7
    %v184 = vsub.s32 %v181, %v183
    %v185 = vrot.slane %v163, %v184
    %v187 = vunpack.c.l.s4 1983009808
    %v188 = vunpack.c.0.s8 %v187
    %v189 = vlaneseq
    %v190 = vshrl.u32 %v189, 7
    %v191 = vsub.s32 %v188, %v190
    %v192 = vrot.slane %v164, %v191
    %v193 = vcombine.low %v171, %v185
    %v194 = vcombine.high %v171, %v185
    %v195 = vcombine.low %v178, %v192
    %v210 = vpack.c.bf16 %v157, %v86
    %v211 = vpack.c.bf16 %v158, %v87
    %v212 = vpack.c.bf16 %v159, %v88
    %v213 = vpack.c.bf16 %v160, %v89
    %v214 = vpack.c.bf16 %v193, %v122
    %v215 = vpack.c.bf16 %v194, %v123
    %v216 = vpack.c.bf16 %v195, %v124
    %v217 = vld [vmem:[%s1] sm:$0xff]
    %v218 = vld [vmem:[%s1 + $0x8] sm:$0xff]
    %v219 = vld [vmem:[%s1 + $0x10] sm:$0xff]
    %v220 = vld [vmem:[%s1 + $0x18] sm:$0xff]
    %v221 = vld [vmem:[%s1 + $0x20] sm:$0xff]
    %v222 = vld [vmem:[%s1 + $0x28] sm:$0xff]
    %v223 = vld [vmem:[%s1 + $0x30] sm:$0xff]
    %v224 = vld [vmem:[%s1 + $0x38] sm:$0xff]
    %v225 = vld [vmem:[%s1 + $0x40] sm:$0xff]
    %v226 = vld [vmem:[%s1 + $0x48] sm:$0xff]
    %v227 = vld [vmem:[%s1 + $0x50] sm:$0xff]
    %v228 = vld [vmem:[%s1 + $0x58] sm:$0xff]
    %v229 = vld [vmem:[%s1 + $0x60] sm:$0xff]
    %v230 = vld [vmem:[%s1 + $0x68] sm:$0xff]
    %v231 = vld [vmem:[%s1 + $0x70] sm:$0xff]
    %v232 = vld [vmem:[%s1 + $0x78] sm:$0xff]
    %v233 = vld [vmem:[%s1 + $0x80] sm:$0xff]
    %v234 = vld [vmem:[%s1 + $0x88] sm:$0xff]
    %v235 = vld [vmem:[%s1 + $0x90] sm:$0xff]
    %v236 = vld [vmem:[%s1 + $0x98] sm:$0xff]
    %v237 = vld [vmem:[%s1 + $0xa0] sm:$0xff]
    %v238 = vld [vmem:[%s1 + $0xa8] sm:$0xff]
    %v239 = vld [vmem:[%s1 + $0xb0] sm:$0xff]
    %v240 = vld [vmem:[%s1 + $0xb8] sm:$0xff]
    %v241 = vld [vmem:[%s1 + $0xc0] sm:$0xff]
    %v242 = vld [vmem:[%s1 + $0xc8] sm:$0xff]
    %v243 = vld [vmem:[%s1 + $0xd0] sm:$0xff]
    %v244 = vld [vmem:[%s1 + $0xd8] sm:$0xff]
    %v245 = vld [vmem:[%s1 + $0xe0] sm:$0xff]
    %v246 = vld [vmem:[%s1 + $0xe8] sm:$0xff]
    %v247 = vld [vmem:[%s1 + $0xf0] sm:$0xff]
    %v248 = vld [vmem:[%s1 + $0xf8] sm:$0xff]
    %v249 = vld [vmem:[%s1 + $0x100] sm:$0xff]
    %v250 = vld [vmem:[%s1 + $0x108] sm:$0xff]
    %v251 = vld [vmem:[%s1 + $0x110] sm:$0xff]
    %v252 = vld [vmem:[%s1 + $0x118] sm:$0xff]
    %v253 = vld [vmem:[%s1 + $0x120] sm:$0xff]
    %v254 = vld [vmem:[%s1 + $0x128] sm:$0xff]
    %v255 = vld [vmem:[%s1 + $0x130] sm:$0xff]
    %v256 = vld [vmem:[%s1 + $0x138] sm:$0xff]
    %v257 = vld [vmem:[%s1 + $0x140] sm:$0xff]
    %v258 = vld [vmem:[%s1 + $0x148] sm:$0xff]
    %v259 = vld [vmem:[%s1 + $0x150] sm:$0xff]
    %v260 = vld [vmem:[%s1 + $0x158] sm:$0xff]
    %v261 = vld [vmem:[%s1 + $0x160] sm:$0xff]
    %v262 = vld [vmem:[%s1 + $0x168] sm:$0xff]
    %v263 = vld [vmem:[%s1 + $0x170] sm:$0xff]
    %v264 = vld [vmem:[%s1 + $0x178] sm:$0xff]
    %v265 = vld [vmem:[%s1 + $0x180] sm:$0xff]
    %v266 = vld [vmem:[%s1 + $0x188] sm:$0xff]
    %v267 = vld [vmem:[%s1 + $0x190] sm:$0xff]
    %v268 = vld [vmem:[%s1 + $0x198] sm:$0xff]
    %v269 = vld [vmem:[%s1 + $0x1a0] sm:$0xff]
    %v270 = vld [vmem:[%s1 + $0x1a8] sm:$0xff]
    %v271 = vld [vmem:[%s1 + $0x1b0] sm:$0xff]
    %v272 = vld [vmem:[%s1 + $0x1b8] sm:$0xff]
    %v273 = vld [vmem:[%s1 + $0x1c0] sm:$0xff]
    %v274 = vld [vmem:[%s1 + $0x1c8] sm:$0xff]
    %v275 = vld [vmem:[%s1 + $0x1d0] sm:$0xff]
    %v276 = vld [vmem:[%s1 + $0x1d8] sm:$0xff]
    %v277 = vld [vmem:[%s1 + $0x1e0] sm:$0xff]
    %v278 = vld [vmem:[%s1 + $0x1e8] sm:$0xff]
    %v279 = vld [vmem:[%s1 + $0x1f0] sm:$0xff]
    %v280 = vld [vmem:[%s1 + $0x1f8] sm:$0xff]
    %v281 = vld [vmem:[%s1 + $0x200] sm:$0xff]
    %v282 = vld [vmem:[%s1 + $0x208] sm:$0xff]
    %v283 = vld [vmem:[%s1 + $0x210] sm:$0xff]
    %v284 = vld [vmem:[%s1 + $0x218] sm:$0xff]
    %v285 = vld [vmem:[%s1 + $0x220] sm:$0xff]
    %v286 = vld [vmem:[%s1 + $0x228] sm:$0xff]
    %v287 = vld [vmem:[%s1 + $0x230] sm:$0xff]
    %v288 = vld [vmem:[%s1 + $0x238] sm:$0xff]
    %v289 = vld [vmem:[%s1 + $0x240] sm:$0xff]
    %v290 = vld [vmem:[%s1 + $0x248] sm:$0xff]
    %v291 = vld [vmem:[%s1 + $0x250] sm:$0xff]
    %v292 = vld [vmem:[%s1 + $0x258] sm:$0xff]
    %v293 = vld [vmem:[%s1 + $0x260] sm:$0xff]
    %v294 = vld [vmem:[%s1 + $0x268] sm:$0xff]
    %v295 = vld [vmem:[%s1 + $0x270] sm:$0xff]
    %v296 = vld [vmem:[%s1 + $0x278] sm:$0xff]
    %v297 = vld [vmem:[%s1 + $0x280] sm:$0xff]
    %v298 = vld [vmem:[%s1 + $0x288] sm:$0xff]
    %v299 = vld [vmem:[%s1 + $0x290] sm:$0xff]
    %v300 = vld [vmem:[%s1 + $0x298] sm:$0xff]
    %v301 = vld [vmem:[%s1 + $0x2a0] sm:$0xff]
    %v302 = vld [vmem:[%s1 + $0x2a8] sm:$0xff]
    %v303 = vld [vmem:[%s1 + $0x2b0] sm:$0xff]
    %v304 = vld [vmem:[%s1 + $0x2b8] sm:$0xff]
    %v305 = vld [vmem:[%s1 + $0x2c0] sm:$0xff]
    %v306 = vld [vmem:[%s1 + $0x2c8] sm:$0xff]
    %v307 = vld [vmem:[%s1 + $0x2d0] sm:$0xff]
    %v308 = vld [vmem:[%s1 + $0x2d8] sm:$0xff]
    %v309 = vld [vmem:[%s1 + $0x2e0] sm:$0xff]
    %v310 = vld [vmem:[%s1 + $0x2e8] sm:$0xff]
    %v311 = vld [vmem:[%s1 + $0x2f0] sm:$0xff]
    %v312 = vld [vmem:[%s1 + $0x2f8] sm:$0xff]
    %v313 = vld [vmem:[%s1 + $0x300] sm:$0xff]
    %v314 = vld [vmem:[%s1 + $0x308] sm:$0xff]
    %v315 = vld [vmem:[%s2] sm:$0x3]
    %v317 = vlaneseq
    %v318 = vshrl.u32 %v317, 7
    %v319 = vsub.s32 0, %v318
    %v320 = vrot.slane %v315, %v319
    %v321 = vlaneseq
    %v322 = vshrl.u32 %v321, 7
    %v323 = vsub.s32 1, %v322
    %v324 = vrot.slane %v315, %v323
    %v425 = vunpack.c.l.b16 %v217
    %v426 = vunpack.c.h.b16 %v217
    %v427 = vunpack.c.l.b16 %v218
    %v428 = vunpack.c.h.b16 %v218
    %v429 = vunpack.c.l.b16 %v219
    %v430 = vunpack.c.h.b16 %v219
    %v431 = vunpack.c.l.b16 %v220
    %v432 = vunpack.c.h.b16 %v220
    %v433 = vunpack.c.l.b16 %v221
    %v434 = vunpack.c.h.b16 %v221
    %v435 = vunpack.c.l.b16 %v222
    %v436 = vunpack.c.h.b16 %v222
    %v437 = vunpack.c.l.b16 %v223
    %v438 = vunpack.c.h.b16 %v223
    %v439 = vunpack.c.l.b16 %v224
    %v440 = vunpack.c.h.b16 %v224
    %v441 = vunpack.c.l.b16 %v225
    %v442 = vunpack.c.h.b16 %v225
    %v443 = vunpack.c.l.b16 %v226
    %v444 = vunpack.c.h.b16 %v226
    %v445 = vunpack.c.l.b16 %v227
    %v446 = vunpack.c.h.b16 %v227
    %v447 = vunpack.c.l.b16 %v228
    %v448 = vunpack.c.h.b16 %v228
    %v449 = vunpack.c.l.b16 %v229
    %v450 = vunpack.c.h.b16 %v229
    %v451 = vunpack.c.l.b16 %v230
    %v452 = vunpack.c.h.b16 %v230
    %v453 = vunpack.c.l.b16 %v231
    %v454 = vunpack.c.h.b16 %v231
    %v455 = vunpack.c.l.b16 %v232
    %v456 = vunpack.c.h.b16 %v232
    %v457 = vunpack.c.l.b16 %v233
    %v458 = vunpack.c.h.b16 %v233
    %v459 = vunpack.c.l.b16 %v234
    %v460 = vunpack.c.h.b16 %v234
    %v461 = vunpack.c.l.b16 %v235
    %v462 = vunpack.c.h.b16 %v235
    %v463 = vunpack.c.l.b16 %v236
    %v464 = vunpack.c.h.b16 %v236
    %v465 = vunpack.c.l.b16 %v237
    %v466 = vunpack.c.h.b16 %v237
    %v467 = vunpack.c.l.b16 %v238
    %v468 = vunpack.c.h.b16 %v238
    %v469 = vunpack.c.l.b16 %v239
    %v470 = vunpack.c.h.b16 %v239
    %v471 = vunpack.c.l.b16 %v240
    %v472 = vunpack.c.h.b16 %v240
    %v473 = vunpack.c.l.b16 %v241
    %v474 = vunpack.c.h.b16 %v241
    %v475 = vunpack.c.l.b16 %v242
    %v476 = vunpack.c.h.b16 %v242
    %v477 = vunpack.c.l.b16 %v243
    %v478 = vunpack.c.h.b16 %v243
    %v479 = vunpack.c.l.b16 %v244
    %v480 = vunpack.c.h.b16 %v244
    %v481 = vunpack.c.l.b16 %v245
    %v482 = vunpack.c.h.b16 %v245
    %v483 = vunpack.c.l.b16 %v246
    %v484 = vunpack.c.h.b16 %v246
    %v485 = vunpack.c.l.b16 %v247
    %v486 = vunpack.c.h.b16 %v247
    %v487 = vunpack.c.l.b16 %v248
    %v488 = vunpack.c.h.b16 %v248
    %v489 = vunpack.c.l.b16 %v249
    %v490 = vunpack.c.h.b16 %v249
    %v491 = vunpack.c.l.b16 %v250
    %v492 = vunpack.c.h.b16 %v250
    %v493 = vunpack.c.l.b16 %v251
    %v494 = vunpack.c.h.b16 %v251
    %v495 = vunpack.c.l.b16 %v252
    %v496 = vunpack.c.h.b16 %v252
    %v497 = vunpack.c.l.b16 %v253
    %v498 = vunpack.c.h.b16 %v253
    %v499 = vunpack.c.l.b16 %v254
    %v500 = vunpack.c.h.b16 %v254
    %v501 = vunpack.c.l.b16 %v255
    %v502 = vunpack.c.h.b16 %v255
    %v503 = vunpack.c.l.b16 %v256
    %v504 = vunpack.c.h.b16 %v256
    %v505 = vunpack.c.l.b16 %v257
    %v506 = vunpack.c.h.b16 %v257
    %v507 = vunpack.c.l.b16 %v258
    %v508 = vunpack.c.h.b16 %v258
    %v509 = vunpack.c.l.b16 %v259
    %v510 = vunpack.c.h.b16 %v259
    %v511 = vunpack.c.l.b16 %v260
    %v512 = vunpack.c.h.b16 %v260
    %v513 = vunpack.c.l.b16 %v261
    %v514 = vunpack.c.h.b16 %v261
    %v515 = vunpack.c.l.b16 %v262
    %v516 = vunpack.c.h.b16 %v262
    %v517 = vunpack.c.l.b16 %v263
    %v518 = vunpack.c.h.b16 %v263
    %v519 = vunpack.c.l.b16 %v264
    %v520 = vunpack.c.h.b16 %v264
    %v521 = vunpack.c.l.b16 %v265
    %v522 = vunpack.c.h.b16 %v265
    %v523 = vunpack.c.l.b16 %v266
    %v524 = vunpack.c.h.b16 %v266
    %v525 = vunpack.c.l.b16 %v267
    %v526 = vunpack.c.h.b16 %v267
    %v527 = vunpack.c.l.b16 %v268
    %v528 = vunpack.c.h.b16 %v268
    %v529 = vunpack.c.l.b16 %v269
    %v530 = vunpack.c.h.b16 %v269
    %v531 = vunpack.c.l.b16 %v270
    %v532 = vunpack.c.h.b16 %v270
    %v533 = vunpack.c.l.b16 %v271
    %v534 = vunpack.c.h.b16 %v271
    %v535 = vunpack.c.l.b16 %v272
    %v536 = vunpack.c.h.b16 %v272
    %v537 = vunpack.c.l.b16 %v273
    %v538 = vunpack.c.h.b16 %v273
    %v539 = vunpack.c.l.b16 %v274
    %v540 = vunpack.c.h.b16 %v274
    %v541 = vunpack.c.l.b16 %v275
    %v542 = vunpack.c.h.b16 %v275
    %v543 = vunpack.c.l.b16 %v276
    %v544 = vunpack.c.h.b16 %v276
    %v545 = vunpack.c.l.b16 %v277
    %v546 = vunpack.c.h.b16 %v277
    %v547 = vunpack.c.l.b16 %v278
    %v548 = vunpack.c.h.b16 %v278
    %v549 = vunpack.c.l.b16 %v279
    %v550 = vunpack.c.h.b16 %v279
    %v551 = vunpack.c.l.b16 %v280
    %v552 = vunpack.c.h.b16 %v280
    %v553 = vunpack.c.l.b16 %v281
    %v554 = vunpack.c.h.b16 %v281
    %v555 = vunpack.c.l.b16 %v282
    %v556 = vunpack.c.h.b16 %v282
    %v557 = vunpack.c.l.b16 %v283
    %v558 = vunpack.c.h.b16 %v283
    %v559 = vunpack.c.l.b16 %v284
    %v560 = vunpack.c.h.b16 %v284
    %v561 = vunpack.c.l.b16 %v285
    %v562 = vunpack.c.h.b16 %v285
    %v563 = vunpack.c.l.b16 %v286
    %v564 = vunpack.c.h.b16 %v286
    %v565 = vunpack.c.l.b16 %v287
    %v566 = vunpack.c.h.b16 %v287
    %v567 = vunpack.c.l.b16 %v288
    %v568 = vunpack.c.h.b16 %v288
    %v569 = vunpack.c.l.b16 %v289
    %v570 = vunpack.c.h.b16 %v289
    %v571 = vunpack.c.l.b16 %v290
    %v572 = vunpack.c.h.b16 %v290
    %v573 = vunpack.c.l.b16 %v291
    %v574 = vunpack.c.h.b16 %v291
    %v575 = vunpack.c.l.b16 %v292
    %v576 = vunpack.c.h.b16 %v292
    %v577 = vunpack.c.l.b16 %v293
    %v578 = vunpack.c.h.b16 %v293
    %v579 = vunpack.c.l.b16 %v294
    %v580 = vunpack.c.h.b16 %v294
    %v581 = vunpack.c.l.b16 %v295
    %v582 = vunpack.c.h.b16 %v295
    %v583 = vunpack.c.l.b16 %v296
    %v584 = vunpack.c.h.b16 %v296
    %v585 = vunpack.c.l.b16 %v297
    %v586 = vunpack.c.h.b16 %v297
    %v587 = vunpack.c.l.b16 %v298
    %v588 = vunpack.c.h.b16 %v298
    %v589 = vunpack.c.l.b16 %v299
    %v590 = vunpack.c.h.b16 %v299
    %v591 = vunpack.c.l.b16 %v300
    %v592 = vunpack.c.h.b16 %v300
    %v593 = vunpack.c.l.b16 %v301
    %v594 = vunpack.c.h.b16 %v301
    %v595 = vunpack.c.l.b16 %v302
    %v596 = vunpack.c.h.b16 %v302
    %v597 = vunpack.c.l.b16 %v303
    %v598 = vunpack.c.h.b16 %v303
    %v599 = vunpack.c.l.b16 %v304
    %v600 = vunpack.c.h.b16 %v304
    %v601 = vunpack.c.l.b16 %v305
    %v602 = vunpack.c.h.b16 %v305
    %v603 = vunpack.c.l.b16 %v306
    %v604 = vunpack.c.h.b16 %v306
    %v605 = vunpack.c.l.b16 %v307
    %v606 = vunpack.c.h.b16 %v307
    %v607 = vunpack.c.l.b16 %v308
    %v608 = vunpack.c.h.b16 %v308
    %v609 = vunpack.c.l.b16 %v309
    %v610 = vunpack.c.h.b16 %v309
    %v611 = vunpack.c.l.b16 %v310
    %v612 = vunpack.c.h.b16 %v310
    %v613 = vunpack.c.l.b16 %v311
    %v614 = vunpack.c.h.b16 %v311
    %v615 = vunpack.c.l.b16 %v312
    %v616 = vunpack.c.h.b16 %v312
    %v617 = vunpack.c.l.b16 %v313
    %v618 = vunpack.c.h.b16 %v313
    %v619 = vunpack.c.l.b16 %v314
    %v620 = vunpack.c.h.b16 %v314
    %v621 = vpack.c.b16 %v427, %v425
    %v622 = vpack.c.b16 %v428, %v426
    %v623 = vpack.c.b16 %v431, %v429
    %v624 = vpack.c.b16 %v432, %v430
    %v625 = vpack.c.b16 %v435, %v433
    %v626 = vpack.c.b16 %v436, %v434
    %v627 = vpack.c.b16 %v439, %v437
    %v628 = vpack.c.b16 %v440, %v438
    %v629 = vpack.c.b16 %v443, %v441
    %v630 = vpack.c.b16 %v444, %v442
    %v631 = vpack.c.b16 %v447, %v445
    %v632 = vpack.c.b16 %v448, %v446
    %v633 = vpack.c.b16 %v451, %v449
    %v634 = vpack.c.b16 %v452, %v450
    %v635 = vpack.c.b16 %v455, %v453
    %v636 = vpack.c.b16 %v456, %v454
    %v637 = vpack.c.b16 %v459, %v457
    %v638 = vpack.c.b16 %v460, %v458
    %v639 = vpack.c.b16 %v463, %v461
    %v640 = vpack.c.b16 %v464, %v462
    %v641 = vpack.c.b16 %v467, %v465
    %v642 = vpack.c.b16 %v468, %v466
    %v643 = vpack.c.b16 %v471, %v469
    %v644 = vpack.c.b16 %v472, %v470
    %v645 = vpack.c.b16 %v475, %v473
    %v646 = vpack.c.b16 %v476, %v474
    %v647 = vpack.c.b16 %v479, %v477
    %v648 = vpack.c.b16 %v480, %v478
    %v649 = vpack.c.b16 %v483, %v481
    %v650 = vpack.c.b16 %v484, %v482
    %v651 = vpack.c.b16 %v487, %v485
    %v652 = vpack.c.b16 %v488, %v486
    %v653 = vpack.c.b16 %v491, %v489
    %v654 = vpack.c.b16 %v492, %v490
    %v655 = vpack.c.b16 %v495, %v493
    %v656 = vpack.c.b16 %v496, %v494
    %v657 = vpack.c.b16 %v499, %v497
    %v658 = vpack.c.b16 %v500, %v498
    %v659 = vpack.c.b16 %v503, %v501
    %v660 = vpack.c.b16 %v504, %v502
    %v661 = vpack.c.b16 %v507, %v505
    %v662 = vpack.c.b16 %v508, %v506
    %v663 = vpack.c.b16 %v511, %v509
    %v664 = vpack.c.b16 %v512, %v510
    %v665 = vpack.c.b16 %v515, %v513
    %v666 = vpack.c.b16 %v516, %v514
    %v667 = vpack.c.b16 %v519, %v517
    %v668 = vpack.c.b16 %v520, %v518
    %v669 = vpack.c.b16 %v523, %v521
    %v670 = vpack.c.b16 %v524, %v522
    %v671 = vpack.c.b16 %v527, %v525
    %v672 = vpack.c.b16 %v528, %v526
    %v673 = vpack.c.b16 %v531, %v529
    %v674 = vpack.c.b16 %v532, %v530
    %v675 = vpack.c.b16 %v535, %v533
    %v676 = vpack.c.b16 %v536, %v534
    %v677 = vpack.c.b16 %v539, %v537
    %v678 = vpack.c.b16 %v540, %v538
    %v679 = vpack.c.b16 %v543, %v541
    %v680 = vpack.c.b16 %v544, %v542
    %v681 = vpack.c.b16 %v547, %v545
    %v682 = vpack.c.b16 %v548, %v546
    %v683 = vpack.c.b16 %v551, %v549
    %v684 = vpack.c.b16 %v552, %v550
    %v685 = vpack.c.b16 %v555, %v553
    %v686 = vpack.c.b16 %v556, %v554
    %v687 = vpack.c.b16 %v559, %v557
    %v688 = vpack.c.b16 %v560, %v558
    %v689 = vpack.c.b16 %v563, %v561
    %v690 = vpack.c.b16 %v564, %v562
    %v691 = vpack.c.b16 %v567, %v565
    %v692 = vpack.c.b16 %v568, %v566
    %v693 = vpack.c.b16 %v571, %v569
    %v694 = vpack.c.b16 %v572, %v570
    %v695 = vpack.c.b16 %v575, %v573
    %v696 = vpack.c.b16 %v576, %v574
    %v697 = vpack.c.b16 %v579, %v577
    %v698 = vpack.c.b16 %v580, %v578
    %v699 = vpack.c.b16 %v583, %v581
    %v700 = vpack.c.b16 %v584, %v582
    %v701 = vpack.c.b16 %v587, %v585
    %v702 = vpack.c.b16 %v588, %v586
    %v703 = vpack.c.b16 %v591, %v589
    %v704 = vpack.c.b16 %v592, %v590
    %v705 = vpack.c.b16 %v595, %v593
    %v706 = vpack.c.b16 %v596, %v594
    %v707 = vpack.c.b16 %v599, %v597
    %v708 = vpack.c.b16 %v600, %v598
    %v709 = vpack.c.b16 %v603, %v601
    %v710 = vpack.c.b16 %v604, %v602
    %v711 = vpack.c.b16 %v607, %v605
    %v712 = vpack.c.b16 %v608, %v606
    %v713 = vpack.c.b16 %v611, %v609
    %v714 = vpack.c.b16 %v612, %v610
    %v715 = vpack.c.b16 %v615, %v613
    %v716 = vpack.c.b16 %v616, %v614
    %v717 = vpack.c.b16 %v619, %v617
    %v718 = vpack.c.b16 %v620, %v618
    %vm817 = vcmask 130048
    %v819 = vsel %vm817, %v216, 0
    %821 = vmatprep.subr.bf16.mxu0 %v622
    %822 = vmatpush1.bf16.msra.mxu0 %v621
    %823 = vmatprep.subr.bf16.mxu0 %v624
    %824 = vmatpush1.bf16.msra.mxu0 %v623
    %825 = vmatprep.subr.bf16.mxu0 %v626
    %826 = vmatpush1.bf16.msra.mxu0 %v625
    %827 = vmatprep.subr.bf16.mxu0 %v628
    %828 = vmatpush1.bf16.msra.mxu0 %v627
    %829 = vmatprep.subr.bf16.mxu0 %v630
    %830 = vmatpush1.bf16.msra.mxu0 %v629
    %831 = vmatprep.subr.bf16.mxu0 %v632
    %832 = vmatpush1.bf16.msra.mxu0 %v631
    %833 = vmatprep.subr.bf16.mxu0 %v634
    %834 = vmatpush1.bf16.msra.mxu0 %v633
    %835 = vmatprep.subr.bf16.mxu0 %v636
    %836 = vmatpush1.bf16.msra.mxu0 %v635
    %837 = vmatprep.subr.bf16.mxu0 %v638
    %838 = vmatpush1.bf16.msra.mxu0 %v637
    %839 = vmatprep.subr.bf16.mxu0 %v640
    %840 = vmatpush1.bf16.msra.mxu0 %v639
    %841 = vmatprep.subr.bf16.mxu0 %v642
    %842 = vmatpush1.bf16.msra.mxu0 %v641
    %843 = vmatprep.subr.bf16.mxu0 %v644
    %844 = vmatpush1.bf16.msra.mxu0 %v643
    %845 = vmatprep.subr.bf16.mxu0 %v646
    %846 = vmatpush1.bf16.msra.mxu0 %v645
    %847 = vmatprep.subr.bf16.mxu0 %v648
    %848 = vmatpush1.bf16.msra.mxu0 %v647
    %849 = vmatprep.subr.bf16.mxu0 %v650
    %850 = vmatpush1.bf16.msra.mxu0 %v649
    %851 = vmatprep.subr.bf16.mxu0 %v652
    %852 = vmatpush1.bf16.msra.mxu0 %v651
    %853 = vmatprep.mubr.bf16.mxu0 %v211
    %854 = vmatmul.mubr.bf16.gmra.mrb[0].mxu0 %v210
    %v855 = vpop.f32.mrb[0].mxu0
    %v856 = vadd.f32 %v320, %v855
    %v857 = vpop.f32.mrb[0].mxu0
    %v858 = vadd.f32 %v324, %v857
    %v859 = vpop.f32.mrb[0].mxu0
    %v860 = vadd.f32 %v320, %v859
    %v861 = vpop.f32.mrb[0].mxu0
    %v862 = vadd.f32 %v324, %v861
    %863 = vdwg.mxu0
    %864 = vmatprep.subr.bf16.mxu0 %v654
    %865 = vmatpush1.bf16.msra.mxu0 %v653
    %866 = vmatprep.subr.bf16.mxu0 %v656
    %867 = vmatpush1.bf16.msra.mxu0 %v655
    %868 = vmatprep.subr.bf16.mxu0 %v658
    %869 = vmatpush1.bf16.msra.mxu0 %v657
    %870 = vmatprep.subr.bf16.mxu0 %v660
    %871 = vmatpush1.bf16.msra.mxu0 %v659
    %872 = vmatprep.subr.bf16.mxu0 %v662
    %873 = vmatpush1.bf16.msra.mxu0 %v661
    %874 = vmatprep.subr.bf16.mxu0 %v664
    %875 = vmatpush1.bf16.msra.mxu0 %v663
    %876 = vmatprep.subr.bf16.mxu0 %v666
    %877 = vmatpush1.bf16.msra.mxu0 %v665
    %878 = vmatprep.subr.bf16.mxu0 %v668
    %879 = vmatpush1.bf16.msra.mxu0 %v667
    %880 = vmatprep.subr.bf16.mxu0 %v670
    %881 = vmatpush1.bf16.msra.mxu0 %v669
    %882 = vmatprep.subr.bf16.mxu0 %v672
    %883 = vmatpush1.bf16.msra.mxu0 %v671
    %884 = vmatprep.subr.bf16.mxu0 %v674
    %885 = vmatpush1.bf16.msra.mxu0 %v673
    %886 = vmatprep.subr.bf16.mxu0 %v676
    %887 = vmatpush1.bf16.msra.mxu0 %v675
    %888 = vmatprep.subr.bf16.mxu0 %v678
    %889 = vmatpush1.bf16.msra.mxu0 %v677
    %890 = vmatprep.subr.bf16.mxu0 %v680
    %891 = vmatpush1.bf16.msra.mxu0 %v679
    %892 = vmatprep.subr.bf16.mxu0 %v682
    %893 = vmatpush1.bf16.msra.mxu0 %v681
    %894 = vmatprep.subr.bf16.mxu0 %v684
    %895 = vmatpush1.bf16.msra.mxu0 %v683
    %896 = vmatprep.mubr.bf16.mxu0 %v213
    %897 = vmatmul.mubr.bf16.gmra.mrb[0].mxu0 %v212
    %v898 = vpop.f32.mrb[0].mxu0
    %v899 = vadd.f32 %v856, %v898
    %v900 = vpop.f32.mrb[0].mxu0
    %v901 = vadd.f32 %v858, %v900
    %v902 = vpop.f32.mrb[0].mxu0
    %v903 = vadd.f32 %v860, %v902
    %v904 = vpop.f32.mrb[0].mxu0
    %v905 = vadd.f32 %v862, %v904
    %906 = vdwg.mxu0
    %907 = vmatprep.subr.bf16.mxu0 %v686
    %908 = vmatpush1.bf16.msra.mxu0 %v685
    %909 = vmatprep.subr.bf16.mxu0 %v688
    %910 = vmatpush1.bf16.msra.mxu0 %v687
    %911 = vmatprep.subr.bf16.mxu0 %v690
    %912 = vmatpush1.bf16.msra.mxu0 %v689
    %913 = vmatprep.subr.bf16.mxu0 %v692
    %914 = vmatpush1.bf16.msra.mxu0 %v691
    %915 = vmatprep.subr.bf16.mxu0 %v694
    %916 = vmatpush1.bf16.msra.mxu0 %v693
    %917 = vmatprep.subr.bf16.mxu0 %v696
    %918 = vmatpush1.bf16.msra.mxu0 %v695
    %919 = vmatprep.subr.bf16.mxu0 %v698
    %920 = vmatpush1.bf16.msra.mxu0 %v697
    %921 = vmatprep.subr.bf16.mxu0 %v700
    %922 = vmatpush1.bf16.msra.mxu0 %v699
    %923 = vmatprep.subr.bf16.mxu0 %v702
    %924 = vmatpush1.bf16.msra.mxu0 %v701
    %925 = vmatprep.subr.bf16.mxu0 %v704
    %926 = vmatpush1.bf16.msra.mxu0 %v703
    %927 = vmatprep.subr.bf16.mxu0 %v706
    %928 = vmatpush1.bf16.msra.mxu0 %v705
    %929 = vmatprep.subr.bf16.mxu0 %v708
    %930 = vmatpush1.bf16.msra.mxu0 %v707
    %931 = vmatprep.subr.bf16.mxu0 %v710
    %932 = vmatpush1.bf16.msra.mxu0 %v709
    %933 = vmatprep.subr.bf16.mxu0 %v712
    %934 = vmatpush1.bf16.msra.mxu0 %v711
    %935 = vmatprep.subr.bf16.mxu0 %v714
    %936 = vmatpush1.bf16.msra.mxu0 %v713
    %937 = vmatprep.subr.bf16.mxu0 %v716
    %938 = vmatpush1.bf16.msra.mxu0 %v715
    %939 = vmatprep.mubr.bf16.mxu0 %v215
    %940 = vmatmul.mubr.bf16.gmra.mrb[0].mxu0 %v214
    %v941 = vpop.f32.mrb[0].mxu0
    %v942 = vadd.f32 %v899, %v941
    %v943 = vpop.f32.mrb[0].mxu0
    %v944 = vadd.f32 %v901, %v943
    %v945 = vpop.f32.mrb[0].mxu0
    %v946 = vadd.f32 %v903, %v945
    %v947 = vpop.f32.mrb[0].mxu0
    %v948 = vadd.f32 %v905, %v947
    %949 = vdwg.mxu0
    %950 = vmatprep.subr.bf16.mxu0 %v718
    %951 = vmatpush1.bf16.msra.mxu0 %v717
    %952 = vmatprep.subr.bf16.mxu0 0
    %953 = vmatpush1.bf16.msra.mxu0 0
    %954 = vmatprep.subr.bf16.mxu0 0
    %955 = vmatpush1.bf16.msra.mxu0 0
    %956 = vmatprep.subr.bf16.mxu0 0
    %957 = vmatpush1.bf16.msra.mxu0 0
    %958 = vmatprep.subr.bf16.mxu0 0
    %959 = vmatpush1.bf16.msra.mxu0 0
    %960 = vmatprep.subr.bf16.mxu0 0
    %961 = vmatpush1.bf16.msra.mxu0 0
    %962 = vmatprep.subr.bf16.mxu0 0
    %963 = vmatpush1.bf16.msra.mxu0 0
    %964 = vmatprep.subr.bf16.mxu0 0
    %965 = vmatpush1.bf16.msra.mxu0 0
    %966 = vmatprep.subr.bf16.mxu0 0
    %967 = vmatpush1.bf16.msra.mxu0 0
    %968 = vmatprep.subr.bf16.mxu0 0
    %969 = vmatpush1.bf16.msra.mxu0 0
    %970 = vmatprep.subr.bf16.mxu0 0
    %971 = vmatpush1.bf16.msra.mxu0 0
    %972 = vmatprep.subr.bf16.mxu0 0
    %973 = vmatpush1.bf16.msra.mxu0 0
    %974 = vmatprep.subr.bf16.mxu0 0
    %975 = vmatpush1.bf16.msra.mxu0 0
    %976 = vmatprep.subr.bf16.mxu0 0
    %977 = vmatpush1.bf16.msra.mxu0 0
    %978 = vmatprep.subr.bf16.mxu0 0
    %979 = vmatpush1.bf16.msra.mxu0 0
    %980 = vmatprep.subr.bf16.mxu0 0
    %981 = vmatpush1.bf16.msra.mxu0 0
    %982 = vmatprep.mubr.bf16.mxu0 0
    %983 = vmatmul.mubr.bf16.gmra.mrb[0].mxu0 %v819
    %v984 = vpop.f32.mrb[0].mxu0
    %v985 = vadd.f32 %v942, %v984
    %v986 = vpop.f32.mrb[0].mxu0
    %v987 = vadd.f32 %v944, %v986
    %v988 = vpop.f32.mrb[0].mxu0
    %v989 = vadd.f32 %v946, %v988
    %v990 = vpop.f32.mrb[0].mxu0
    %v991 = vadd.f32 %v948, %v990
    %992 = vdwg.mxu0
    %v993 = vmax.f32 %v985, 0.0
    %v994 = vmax.f32 %v987, 0.0
    %v995 = vmax.f32 %v989, 0.0
    %v996 = vmax.f32 %v991, 0.0
    %v997 = vpack.c.bf16 %v995, %v993
    %v998 = vpack.c.bf16 %v996, %v994
    %v999 = vld [vmem:[%s3] sm:$0xf]
    %v1000 = vld [vmem:[%s3 + $0x4] sm:$0xf]
    %v1001 = vld [vmem:[%s3 + $0x8] sm:$0xf]
    %v1002 = vld [vmem:[%s3 + $0xc] sm:$0xf]
    %v1003 = vld [vmem:[%s3 + $0x10] sm:$0xf]
    %v1004 = vld [vmem:[%s3 + $0x14] sm:$0xf]
    %v1005 = vld [vmem:[%s3 + $0x18] sm:$0xf]
    %v1006 = vld [vmem:[%s3 + $0x1c] sm:$0xf]
    %v1007 = vld [vmem:[%s3 + $0x20] sm:$0xf]
    %v1008 = vld [vmem:[%s3 + $0x24] sm:$0xf]
    %v1009 = vld [vmem:[%s3 + $0x28] sm:$0xf]
    %v1010 = vld [vmem:[%s3 + $0x2c] sm:$0xf]
    %v1011 = vld [vmem:[%s3 + $0x30] sm:$0xf]
    %v1012 = vld [vmem:[%s3 + $0x34] sm:$0xf]
    %v1013 = vld [vmem:[%s3 + $0x38] sm:$0xf]
    %v1014 = vld [vmem:[%s3 + $0x3c] sm:$0xf]
    %v1015 = vld [vmem:[%s3 + $0x40] sm:$0xf]
    %v1016 = vld [vmem:[%s3 + $0x44] sm:$0xf]
    %v1017 = vld [vmem:[%s3 + $0x48] sm:$0xf]
    %v1018 = vld [vmem:[%s3 + $0x4c] sm:$0xf]
    %v1019 = vld [vmem:[%s3 + $0x50] sm:$0xf]
    %v1020 = vld [vmem:[%s3 + $0x54] sm:$0xf]
    %v1021 = vld [vmem:[%s3 + $0x58] sm:$0xf]
    %v1022 = vld [vmem:[%s3 + $0x5c] sm:$0xf]
    %v1023 = vld [vmem:[%s3 + $0x60] sm:$0xf]
    %v1024 = vld [vmem:[%s3 + $0x64] sm:$0xf]
    %v1025 = vld [vmem:[%s3 + $0x68] sm:$0xf]
    %v1026 = vld [vmem:[%s3 + $0x6c] sm:$0xf]
    %v1027 = vld [vmem:[%s3 + $0x70] sm:$0xf]
    %v1028 = vld [vmem:[%s3 + $0x74] sm:$0xf]
    %v1029 = vld [vmem:[%s3 + $0x78] sm:$0xf]
    %v1030 = vld [vmem:[%s3 + $0x7c] sm:$0xf]
    %v1031 = vld [vmem:[%s4] sm:$0x1]
    %v1033 = vlaneseq
    %v1034 = vshrl.u32 %v1033, 7
    %v1035 = vsub.s32 0, %v1034
    %v1036 = vrot.slane %v1031, %v1035
    %v1070 = vunpack.c.l.b16 %v999
    %v1071 = vunpack.c.l.b16 %v1000
    %v1072 = vunpack.c.l.b16 %v1001
    %v1073 = vunpack.c.l.b16 %v1002
    %v1074 = vunpack.c.l.b16 %v1003
    %v1075 = vunpack.c.l.b16 %v1004
    %v1076 = vunpack.c.l.b16 %v1005
    %v1077 = vunpack.c.l.b16 %v1006
    %v1078 = vunpack.c.l.b16 %v1007
    %v1079 = vunpack.c.l.b16 %v1008
    %v1080 = vunpack.c.l.b16 %v1009
    %v1081 = vunpack.c.l.b16 %v1010
    %v1082 = vunpack.c.l.b16 %v1011
    %v1083 = vunpack.c.l.b16 %v1012
    %v1084 = vunpack.c.l.b16 %v1013
    %v1085 = vunpack.c.l.b16 %v1014
    %v1086 = vunpack.c.l.b16 %v1015
    %v1087 = vunpack.c.l.b16 %v1016
    %v1088 = vunpack.c.l.b16 %v1017
    %v1089 = vunpack.c.l.b16 %v1018
    %v1090 = vunpack.c.l.b16 %v1019
    %v1091 = vunpack.c.l.b16 %v1020
    %v1092 = vunpack.c.l.b16 %v1021
    %v1093 = vunpack.c.l.b16 %v1022
    %v1094 = vunpack.c.l.b16 %v1023
    %v1095 = vunpack.c.l.b16 %v1024
    %v1096 = vunpack.c.l.b16 %v1025
    %v1097 = vunpack.c.l.b16 %v1026
    %v1098 = vunpack.c.l.b16 %v1027
    %v1099 = vunpack.c.l.b16 %v1028
    %v1100 = vunpack.c.l.b16 %v1029
    %v1101 = vunpack.c.l.b16 %v1030
    %v1102 = vpack.c.b16 %v1071, %v1070
    %v1103 = vpack.c.b16 %v1073, %v1072
    %v1104 = vpack.c.b16 %v1075, %v1074
    %v1105 = vpack.c.b16 %v1077, %v1076
    %v1106 = vpack.c.b16 %v1079, %v1078
    %v1107 = vpack.c.b16 %v1081, %v1080
    %v1108 = vpack.c.b16 %v1083, %v1082
    %v1109 = vpack.c.b16 %v1085, %v1084
    %v1110 = vpack.c.b16 %v1087, %v1086
    %v1111 = vpack.c.b16 %v1089, %v1088
    %v1112 = vpack.c.b16 %v1091, %v1090
    %v1113 = vpack.c.b16 %v1093, %v1092
    %v1114 = vpack.c.b16 %v1095, %v1094
    %v1115 = vpack.c.b16 %v1097, %v1096
    %v1116 = vpack.c.b16 %v1099, %v1098
    %v1117 = vpack.c.b16 %v1101, %v1100
    %1134 = vmatprep.subr.bf16.mxu0 0
    %1135 = vmatpush1.bf16.msra.mxu0 %v1102
    %1136 = vmatprep.subr.bf16.mxu0 0
    %1137 = vmatpush1.bf16.msra.mxu0 %v1103
    %1138 = vmatprep.subr.bf16.mxu0 0
    %1139 = vmatpush1.bf16.msra.mxu0 %v1104
    %1140 = vmatprep.subr.bf16.mxu0 0
    %1141 = vmatpush1.bf16.msra.mxu0 %v1105
    %1142 = vmatprep.subr.bf16.mxu0 0
    %1143 = vmatpush1.bf16.msra.mxu0 %v1106
    %1144 = vmatprep.subr.bf16.mxu0 0
    %1145 = vmatpush1.bf16.msra.mxu0 %v1107
    %1146 = vmatprep.subr.bf16.mxu0 0
    %1147 = vmatpush1.bf16.msra.mxu0 %v1108
    %1148 = vmatprep.subr.bf16.mxu0 0
    %1149 = vmatpush1.bf16.msra.mxu0 %v1109
    %1150 = vmatprep.subr.bf16.mxu0 0
    %1151 = vmatpush1.bf16.msra.mxu0 %v1110
    %1152 = vmatprep.subr.bf16.mxu0 0
    %1153 = vmatpush1.bf16.msra.mxu0 %v1111
    %1154 = vmatprep.subr.bf16.mxu0 0
    %1155 = vmatpush1.bf16.msra.mxu0 %v1112
    %1156 = vmatprep.subr.bf16.mxu0 0
    %1157 = vmatpush1.bf16.msra.mxu0 %v1113
    %1158 = vmatprep.subr.bf16.mxu0 0
    %1159 = vmatpush1.bf16.msra.mxu0 %v1114
    %1160 = vmatprep.subr.bf16.mxu0 0
    %1161 = vmatpush1.bf16.msra.mxu0 %v1115
    %1162 = vmatprep.subr.bf16.mxu0 0
    %1163 = vmatpush1.bf16.msra.mxu0 %v1116
    %1164 = vmatprep.subr.bf16.mxu0 0
    %1165 = vmatpush1.bf16.msra.mxu0 %v1117
    %1166 = vmatprep.mubr.bf16.mxu0 %v998
    %1167 = vmatmul.mubr.bf16.gmra.mrb[0].mxu0 %v997
    %v1168 = vpop.f32.mrb[0].mxu0
    %v1169 = vadd.f32 %v1036, %v1168
    %v1170 = vpop.f32.mrb[0].mxu0
    %v1171 = vpop.f32.mrb[0].mxu0
    %v1172 = vadd.f32 %v1036, %v1171
    %v1173 = vpop.f32.mrb[0].mxu0
    %1174 = vdwg.mxu0
    %1175 = vst [vmem:[#allocation2] sm:$0xff] %v1169
    %1176 = vst [vmem:[#allocation2 + $0x8] sm:$0xff] %v1172
    // Predicated region
    $region22: #{mlp_forward.1} parent=1 // pred_check
      _
    $region23: #{mlp_forward.1} parent=1 // pred_check_branch
      %1178 = sbr.rel (0) target = $region25
    $region24: #{mlp_forward.1} parent=1 // pred_region
      %s1180 = ssub.s32 256, 32
      %1181 = vsyncadd [#allocation3], %s1180
      %s1182 = sshll.u32 [#allocation2], 4
      %s1183 = int_to_ptr.vmem [resolvable:$true] %s1182
      %1188 = dma.vmem_to_hbm [thread:$0]  %s1183, 32, %s5, [#allocation3], 32, 32, 2
    $region25: #{mlp_forward.1} parent=1 // pred_fallthru
      _
    // Predicated region
    $region26: #{mlp_forward.1} parent=1 // pred_check
      _
    $region27: #{mlp_forward.1} parent=1 // pred_check_branch
      %1190 = sbr.rel (0) target = $region29
    $region28: #{mlp_forward.1} parent=1 // pred_region
      %1191 = dma.done [#allocation3], 256
    $region29: #{mlp_forward.1} parent=1 // pred_fallthru
      _
    %1192 = vsyncpa [#allocation3], 1

</llo_original>
